<compile_context>
chip_gen: v7x
topology: tpu7x:2x2x1
jax: 0.10.0
libtpu: 0.0.40
codegen_flags: <defaults>
</compile_context>

<pallas_src>
import jax
import jax.numpy as jnp
from jax import lax
from jax.experimental import pallas as pl
from jax.experimental.pallas import tpu as pltpu


def prenorm_linear_kernel(x_ref, w_ref, b_ref, o_ref, xn_ref):
    """One (row-tile i, Dout-tile j) grid step.

    x_ref : (tm, D)   input rows (resident across j: index map ignores j)
    w_ref : (D, tn)   gain-folded weight column slab
    b_ref : (1, tn)   bias slab
    o_ref : (tm, tn)  output tile
    xn_ref: (tm, D)   VMEM scratch in the MXU-feed dtype — layernorm(x),
                      computed at j == 0 and reused for all Dout tiles.
    """
    # --- LayerNorm once per row tile (j == 0), cached for every Dout tile ---
    @pl.when(pl.program_id(1) == 0)
    def _():
        x = x_ref[...].astype(jnp.float32)
        inv_d = jnp.float32(1.0 / x_ref.shape[-1])
        mean = jnp.sum(x, axis=-1, keepdims=True) * inv_d
        xc = x - mean
        # Two-pass variance: robust when |mean| >> std (patch embeddings +
        # positional embeddings); runs only once per row tile.
        var = jnp.sum(xc * xc, axis=-1, keepdims=True) * inv_d
        # eps rule matches the PyTorch LayerNorm in the module
        # (1e-5 for f32 activations, 1e-3 otherwise).
        eps = jnp.float32(1e-5 if x_ref.dtype == jnp.float32 else 1e-3)
        # Gain is already folded into W'; single cast to the MXU feed dtype.
        xn_ref[...] = (xc * lax.rsqrt(var + eps)).astype(xn_ref.dtype)

    # --- Pure MXU + bias add for every j (f32 accumulation) ---
    y = jnp.dot(xn_ref[...], w_ref[...], preferred_element_type=jnp.float32)
    o_ref[...] = (y + b_ref[...].astype(jnp.float32)).astype(o_ref.dtype)


def fold_gain_into_weight(g, w, dtype=None):
    """One-time transform: (x_hat * g) @ W == x_hat @ (g[:, None] * W)."""
    wf = g.astype(jnp.float32)[:, None] * w.astype(jnp.float32)
    return wf.astype(dtype if dtype is not None else w.dtype)


def _default_vmem_limit_bytes():
    # Half of physical VMEM: 64 MiB on v5e/v6e (128 MiB parts), 32 MiB on v7x
    # (64 MiB part) — leaves headroom for compiler scratch / semaphores.
    try:
        cap = int(pltpu.get_tpu_info().vmem_capacity_bytes)
    except Exception:
        cap = 64 * 1024 * 1024
    return max(16 * 1024 * 1024, min(cap // 2, 64 * 1024 * 1024))


def prenorm_linear(x, w_folded, b, *, tm=512, tn=None, vmem_limit_bytes=None):
    """x: [B, S, D]; w_folded: [D, Dout] (LN gain already folded); b: [Dout].

    Returns layernorm(x) @ w_folded + b with output dtype == x.dtype.
    """
    B, S, D = x.shape
    Dout = w_folded.shape[1]
    rows = B * S

    if vmem_limit_bytes is None:
        vmem_limit_bytes = _default_vmem_limit_bytes()
    budget = int(0.75 * vmem_limit_bytes)

    x_bytes = jnp.dtype(x.dtype).itemsize
    w_bytes = jnp.dtype(w_folded.dtype).itemsize
    b_bytes = jnp.dtype(b.dtype).itemsize

    # Row tile: as large as possible (less weight re-streaming, fewer grid
    # steps); full extent if rows < tm (full-extent blocks are always legal).
    tm_eff = rows if rows < tm else tm

    def footprint(tm_c, tn_c):
        return (2 * tm_c * D * x_bytes        # x (double-buffered)
                + 2 * D * tn_c * w_bytes      # weight column slab
                + 2 * tn_c * b_bytes          # bias slab
                + 2 * tm_c * tn_c * x_bytes   # output tile
                + tm_c * D * w_bytes)         # normalized-x scratch

    if tn is None:
        # Weight-resident default: if the whole folded W fits the budget, use
        # tn = Dout so W is DMA'd from HBM exactly once and the j axis
        # collapses to one step.
        if footprint(tm_eff, Dout) <= budget:
            tn_eff = Dout
        else:
            # Multiple of 256 -> full occupancy of the v6e/v7x 256x256 MXUs.
            tn_eff = min(Dout, 512)
    else:
        tn_eff = Dout if Dout < tn else tn

    # If still over budget, shrink the row tile (keeps a multiple of 8).
    while (footprint(tm_eff, tn_eff) > budget and tm_eff >= 128
           and tm_eff % 16 == 0):
        tm_eff //= 2

    grid = (pl.cdiv(rows, tm_eff), pl.cdiv(Dout, tn_eff))

    x2 = x.reshape(rows, D)
    b2 = b.reshape(1, Dout)

    out2 = pl.pallas_call(
        prenorm_linear_kernel,
        out_shape=jax.ShapeDtypeStruct((rows, Dout), x.dtype),
        grid_spec=pltpu.PrefetchScalarGridSpec(
            num_scalar_prefetch=0,
            grid=grid,
            in_specs=[
                # x tile resident across the inner Dout axis (index map
                # ignores j) -> streamed from HBM once per row tile.
                pl.BlockSpec((tm_eff, D), lambda i, j: (i, 0)),
                pl.BlockSpec((D, tn_eff), lambda i, j: (0, j)),
                pl.BlockSpec((1, tn_eff), lambda i, j: (0, j)),
            ],
            out_specs=pl.BlockSpec((tm_eff, tn_eff), lambda i, j: (i, j)),
            scratch_shapes=[pltpu.VMEM((tm_eff, D), w_folded.dtype)],
        ),
        compiler_params=pltpu.CompilerParams(
            # Row axis parallel (shards across the two TensorCores on v7x);
            # Dout axis arbitrary (it carries the normalized-x scratch).
            dimension_semantics=("parallel", "arbitrary"),
            vmem_limit_bytes=vmem_limit_bytes,
        ),
    )(x2, w_folded, b2)
    return out2.reshape(B, S, Dout)


def prenorm_linear_ref(x, g, w, b):
    """Pure-JAX reference with the module's op order (LN with gain, then GEMM)."""
    eps = 1e-5 if x.dtype == jnp.float32 else 1e-3
    xf = x.astype(jnp.float32)
    mean = jnp.mean(xf, axis=-1, keepdims=True)
    var = jnp.mean((xf - mean) ** 2, axis=-1, keepdims=True)
    normed = (xf - mean) * lax.rsqrt(var + eps) * g.astype(jnp.float32)
    return normed @ w.astype(jnp.float32) + b.astype(jnp.float32)


if __name__ == "__main__":
    key = jax.random.PRNGKey(0)
    kx, kg, kw, kb = jax.random.split(key, 4)

    # Small ViT-like shapes: dim=128 tokens, 72 patches per image, batch 2.
    # Dout=384 models Attention.to_qkv with dim_head=64, heads=2 (inner*3).
    B, N, D, Dout = 2, 72, 128, 384

    x = jax.random.normal(kx, (B, N, D), dtype=jnp.float32)
    g = 1.0 + 0.1 * jax.random.normal(kg, (D,), dtype=jnp.float32)  # LN gain
    w = jax.random.normal(kw, (D, Dout), dtype=jnp.float32) * 0.02
    b = jax.random.normal(kb, (Dout,), dtype=jnp.float32) * 0.01

    ref = prenorm_linear_ref(x, g, w, b)

    # ---- f32 correctness path: small tiles force a 2-D grid (3 row tiles,
    # one partial, and 3 Dout tiles) so the scratch-cached LayerNorm reuse
    # across j>0 is exercised.  (Production defaults pick tn = Dout / >=256.)
    w_f32 = fold_gain_into_weight(g, w)
    out = prenorm_linear(x, w_f32, b, tm=64, tn=128)
    jax.block_until_ready(out)
    err = float(jnp.max(jnp.abs(out - ref)))
    assert jnp.allclose(out, ref, atol=1e-4, rtol=1e-4), f"f32 max abs err {err}"

    # ---- bf16 end-to-end path (real-model dtype policy): bf16 x / W' / out,
    # f32 LN statistics and f32 MXU accumulation.  Default tiles -> the whole
    # folded weight is VMEM-resident (tn = Dout, single j step).
    x_bf16 = x.astype(jnp.bfloat16)
    w_bf16 = fold_gain_into_weight(g, w, dtype=jnp.bfloat16)
    ref_bf16 = prenorm_linear_ref(x_bf16, g, w, b)   # eps=1e-3, as in the module
    out_bf16 = prenorm_linear(x_bf16, w_bf16, b)
    jax.block_until_ready(out_bf16)
    out_bf16_f32 = out_bf16.astype(jnp.float32)
    err_bf16 = float(jnp.max(jnp.abs(out_bf16_f32 - ref_bf16)))
    assert jnp.allclose(out_bf16_f32, ref_bf16, atol=5e-2, rtol=5e-2), (
        f"bf16 max abs err {err_bf16}")

    print("KERNEL_OK")
</pallas_src>

<mosaic_0001>
module attributes {stable_mosaic.version = 11 : i64} {
  func.func @prenorm_linear_kernel(%arg0: i32, %arg1: i32, %arg2: memref<64x128xf32, #tpu.memory_space<vmem>>, %arg3: memref<128x128xf32, #tpu.memory_space<vmem>>, %arg4: memref<1x128xf32, #tpu.memory_space<vmem>>, %arg5: memref<64x128xf32, #tpu.memory_space<vmem>>, %arg6: memref<64x128xf32, #tpu.memory_space<vmem>>) attributes {dimension_semantics = [#tpu.dimension_semantics<parallel>, #tpu.dimension_semantics<arbitrary>], iteration_bounds = array<i64: 3, 3>, scalar_prefetch = 0 : i64, scratch_operands = 1 : i64, tpu.core_type = #tpu.core_type<tc>, window_params = [{transform_indices = @transform_0, window_bounds = array<i64: 64, 128>}, {transform_indices = @transform_1, window_bounds = array<i64: 128, 128>}, {transform_indices = @transform_2, window_bounds = array<i64: 1, 128>}, {transform_indices = @transform_3, window_bounds = array<i64: 64, 128>}]} {
    %c0_i32 = arith.constant 0 : i32
    %0 = arith.cmpi eq, %arg1, %c0_i32 : i32
    %1 = arith.extui %0 : i1 to i32
    %c0_i32_0 = arith.constant 0 : i32
    %2 = arith.cmpi ne, %1, %c0_i32_0 : i32
    scf.if %2 {
      %c0_8 = arith.constant 0 : index
      %c0_9 = arith.constant 0 : index
      %10 = vector.load %arg2[%c0_8, %c0_9] : memref<64x128xf32, #tpu.memory_space<vmem>>, vector<64x128xf32>
      %cst_10 = arith.constant dense<0.000000e+00> : vector<64xf32>
      %11 = vector.multi_reduction <add>, %10, %cst_10 [1] : vector<64x128xf32> to vector<64xf32>
      %12 = vector.shape_cast %11 : vector<64xf32> to vector<64x1xf32>
      %cst_11 = arith.constant 7.812500e-03 : f32
      %13 = vector.broadcast %cst_11 : f32 to vector<64x1xf32>
      %14 = arith.mulf %12, %13 : vector<64x1xf32>
      %15 = vector.broadcast %14 : vector<64x1xf32> to vector<64x128xf32>
      %16 = arith.subf %10, %15 : vector<64x128xf32>
      %17 = arith.mulf %16, %16 : vector<64x128xf32>
      %cst_12 = arith.constant dense<0.000000e+00> : vector<64xf32>
      %18 = vector.multi_reduction <add>, %17, %cst_12 [1] : vector<64x128xf32> to vector<64xf32>
      %19 = vector.shape_cast %18 : vector<64xf32> to vector<64x1xf32>
      %cst_13 = arith.constant 7.812500e-03 : f32
      %20 = vector.broadcast %cst_13 : f32 to vector<64x1xf32>
      %21 = arith.mulf %19, %20 : vector<64x1xf32>
      %cst_14 = arith.constant 9.99999974E-6 : f32
      %22 = vector.broadcast %cst_14 : f32 to vector<64x1xf32>
      %23 = arith.addf %21, %22 : vector<64x1xf32>
      %24 = math.rsqrt %23 : vector<64x1xf32>
      %25 = vector.broadcast %24 : vector<64x1xf32> to vector<64x128xf32>
      %26 = arith.mulf %16, %25 : vector<64x128xf32>
      %c0_15 = arith.constant 0 : index
      %c0_16 = arith.constant 0 : index
      %27 = vector.load %arg6[%c0_15, %c0_16] : memref<64x128xf32, #tpu.memory_space<vmem>>, vector<64x128xf32>
      tpu.vector_store %arg6[%c0_15, %c0_16], %26 {strides = array<i32>} : memref<64x128xf32, #tpu.memory_space<vmem>>, vector<64x128xf32>,
    } else {
    }
    %c0 = arith.constant 0 : index
    %c0_1 = arith.constant 0 : index
    %3 = vector.load %arg6[%c0, %c0_1] : memref<64x128xf32, #tpu.memory_space<vmem>>, vector<64x128xf32>
    %c0_2 = arith.constant 0 : index
    %c0_3 = arith.constant 0 : index
    %4 = vector.load %arg3[%c0_2, %c0_3] : memref<128x128xf32, #tpu.memory_space<vmem>>, vector<128x128xf32>
    %cst = arith.constant dense<0.000000e+00> : vector<64x128xf32>
    %5 = tpu.matmul %3, %4, %cst {dimension_numbers = #tpu.dot_dimension_numbers<[1], [0], [0], [1], [0, 0, 1, 1], [], []>} : vector<64x128xf32>, vector<128x128xf32>, vector<64x128xf32> -> vector<64x128xf32>
    %c0_4 = arith.constant 0 : index
    %c0_5 = arith.constant 0 : index
    %6 = vector.load %arg4[%c0_4, %c0_5] : memref<1x128xf32, #tpu.memory_space<vmem>>, vector<1x128xf32>
    %7 = vector.broadcast %6 : vector<1x128xf32> to vector<64x128xf32>
    %8 = arith.addf %5, %7 : vector<64x128xf32>
    %c0_6 = arith.constant 0 : index
    %c0_7 = arith.constant 0 : index
    %9 = vector.load %arg5[%c0_6, %c0_7] : memref<64x128xf32, #tpu.memory_space<vmem>>, vector<64x128xf32>
    tpu.vector_store %arg5[%c0_6, %c0_7], %8 {strides = array<i32>} : memref<64x128xf32, #tpu.memory_space<vmem>>, vector<64x128xf32>,
    return
  }
  func.func @transform_0(%arg0: i32, %arg1: i32) -> (i32, i32) {
    %c0_i32 = arith.constant 0 : i32
    %c0_i32_0 = arith.constant 0 : i32
    return %arg0, %c0_i32 : i32, i32
  }
  func.func @transform_1(%arg0: i32, %arg1: i32) -> (i32, i32) {
    %c0_i32 = arith.constant 0 : i32
    %c0_i32_0 = arith.constant 0 : i32
    return %c0_i32, %arg1 : i32, i32
  }
  func.func @transform_2(%arg0: i32, %arg1: i32) -> (i32, i32) {
    %c0_i32 = arith.constant 0 : i32
    %c0_i32_0 = arith.constant 0 : i32
    return %c0_i32, %arg1 : i32, i32
  }
  func.func @transform_3(%arg0: i32, %arg1: i32) -> (i32, i32) {
    %c0_i32 = arith.constant 0 : i32
    return %arg0, %arg1 : i32, i32
  }
}

</mosaic_0001>

<llo_original>
// kernel: tpu_custom_call.1
$region0: #{tpu_custom_call.1}
  #allocation0 [shape = 'u32[]', space=smem, size = 0x4, offset = 0x4, fixed_abs, tag = 'smem constant byte address 0x4 - core index']
  #allocation1 [shape = 'u32[144,128]{1,0:T(1,128)}', space=vmem, size = 0x12000, scoped, tag = 'internal scratch']
  #allocation2 [shape = 'f32[64,128]{1,0:T(8,128)}', space=vmem, size = 0x8000, scoped, tag = 'scratch operand']
  %s0 = inlined_call_operand.hbm [shape: f32[144,128], index: 0, kind: input, shape index: {}]
  %s1 = inlined_call_operand.hbm [shape: f32[128,384], index: 1, kind: input, shape index: {}]
  %s2 = inlined_call_operand.vmem [shape: f32[1,384], index: 2, kind: input, shape index: {}]
  %s3 = inlined_call_operand.hbm [shape: f32[144,384], index: 3, kind: output, shape index: {}]
  %s4 = sld [smem:[#allocation0]]
  $region57: #{tpu_custom_call.1} parent=0
    _
  %s6 = ssub.s32 1, %s4
  %s7 = scalar_select 0, %s6, %s4
  $region1: #{tpu_custom_call.1} parent=0
    #allocation3 [shape = 'u8[65536]{0}', space=vmem, size = 0x10000, scoped, tag = 'input window, operand 0']
    #allocation4 [shape = 's32[2]{0}', space=sflag, size = 0x8, scoped, tag = 'scoped memory for tpu_custom_call.1']
    #allocation5 [shape = 's32[2]{0}', space=sflag, size = 0x8, scoped, tag = 'scoped memory for tpu_custom_call.1']
    #allocation6 [shape = 'u8[131072]{0}', space=vmem, size = 0x20000, scoped, tag = 'input window, operand 1']
    #allocation7 [shape = 's32[2]{0}', space=sflag, size = 0x8, scoped, tag = 'scoped memory for tpu_custom_call.1']
    #allocation8 [shape = 'u8[65536]{0}', space=vmem, size = 0x10000, scoped, tag = 'output window, operand 0']
    %8 = vsyncpa [#allocation4], 0
    %s9 = scalar_lea.sflag [#allocation4], 1
    %10 = vsyncpa %s9, 0
    %11 = vsyncpa [#allocation7], 0
    %s12 = scalar_lea.sflag [#allocation7], 1
    %13 = vsyncpa %s12, 0
    %14 = vsyncpa [#allocation5], 0
    %s15 = scalar_lea.sflag [#allocation5], 1
    %16 = vsyncpa %s15, 0
    loop: start=0, step=1, limit=11
    $region2: #{tpu_custom_call.1} parent=1 // loop_pre_header
      _
    $region3: #{tpu_custom_call.1} parent=1 // loop_header
      %s18 = sphi 0, %s22
      %p19 = scmp.ge.s32.totalorder %s18, 11
      %s25 = sphi 0, %s37
      %s26 = sphi 0, %s33
      %s27 = sphi 0, %s25
      %s28 = sphi 0, %s26
      %s29 = sphi 0, %s27
      %s30 = sphi 0, %s28
      %s40 = sphi 0, %s42
      %s43 = sphi 0, %s40
      %s44 = sphi 0, %s43
      %s60 = sphi 0, %s44
      %s66 = sphi 0, %s68
      %s69 = sphi 0, %s66
      %s70 = sphi 0, %s69
      %s86 = sphi 0, %s70
      %s92 = sphi 0, %s94
      %s95 = sphi 0, %s92
      %s96 = sphi 0, %s95
      %s112 = sphi 0, %s96
      %s120 = sphi 0, %s122
      %s123 = sphi 0, %s120
      %s124 = sphi 0, %s123
      %s140 = sphi 0, %s124
    $region4: #{tpu_custom_call.1} parent=1 // loop_header_branch
      %21 = sbr.rel (%p19) target = $region8
    $region5: #{tpu_custom_call.1} parent=1 // loop_body
      %s23 = ssub.s32 %s18, 1
      %s24 = ssub.s32 %s18, 2
      %s31 = sadd.s32 1, %s26
      %p32 = scmp.ge.s32.totalorder %s31, 3
      %s33 = scalar_select %p32, 0, %s31
      %s34 = sadd.s32 1, %s25
      %s35 = scalar_select %p32, %s34, %s25
      %p36 = scmp.ge.s32.totalorder %s35, 3
      %s37 = scalar_select %p36, 0, %s35
      %s38 = ssub.s32 %s25, %s37
      %p39 = scmp.eq.s32.totalorder %s38, 0
      %s41 = sadd.s32 %s40, 1
      %s42 = scalar_select %p39, %s40, %s41
      %p45 = pneg %p39
      %p46 = scmp.eq.s32.totalorder %s18, 8
      %p47 = por %p45, %p46
      %p48 = scmp.ne.s32.totalorder %s40, %s43
      %p49 = scmp.eq.s32.totalorder %s18, 0
      %p50 = por %p48, %p49
      %p51 = scmp.ne.s32.totalorder %s40, %s43
      %p52 = scmp.eq.s32.totalorder %s23, 8
      %p53 = por %p51, %p52
      %p54 = scmp.ne.s32.totalorder %s43, %s44
      %p55 = scmp.eq.s32.totalorder %s23, 0
      %p56 = por %p54, %p55
      %p57 = scmp.ne.s32.totalorder %s43, %s44
      %p58 = scmp.eq.s32.totalorder %s24, 8
      %p59 = por %p57, %p58
      %p61 = scmp.ne.s32.totalorder %s44, %s60
      %p62 = scmp.eq.s32.totalorder %s24, 0
      %p63 = por %p61, %p62
      %s64 = ssub.s32 %s26, %s33
      %p65 = scmp.eq.s32.totalorder %s64, 0
      %s67 = sadd.s32 %s66, 1
      %s68 = scalar_select %p65, %s66, %s67
      %p71 = pneg %p65
      %p72 = scmp.eq.s32.totalorder %s18, 8
      %p73 = por %p71, %p72
      %p74 = scmp.ne.s32.totalorder %s66, %s69
      %p75 = scmp.eq.s32.totalorder %s18, 0
      %p76 = por %p74, %p75
      %p77 = scmp.ne.s32.totalorder %s66, %s69
      %p78 = scmp.eq.s32.totalorder %s23, 8
      %p79 = por %p77, %p78
      %p80 = scmp.ne.s32.totalorder %s69, %s70
      %p81 = scmp.eq.s32.totalorder %s23, 0
      %p82 = por %p80, %p81
      %p83 = scmp.ne.s32.totalorder %s69, %s70
      %p84 = scmp.eq.s32.totalorder %s24, 8
      %p85 = por %p83, %p84
      %p87 = scmp.ne.s32.totalorder %s70, %s86
      %p88 = scmp.eq.s32.totalorder %s24, 0
      %p89 = por %p87, %p88
      %s90 = ssub.s32 %s26, %s33
      %p91 = scmp.eq.s32.totalorder %s90, 0
      %s93 = sadd.s32 %s92, 1
      %s94 = scalar_select %p91, %s92, %s93
      %p97 = pneg %p91
      %p98 = scmp.eq.s32.totalorder %s18, 8
      %p99 = por %p97, %p98
      %p100 = scmp.ne.s32.totalorder %s92, %s95
      %p101 = scmp.eq.s32.totalorder %s18, 0
      %p102 = por %p100, %p101
      %p103 = scmp.ne.s32.totalorder %s92, %s95
      %p104 = scmp.eq.s32.totalorder %s23, 8
      %p105 = por %p103, %p104
      %p106 = scmp.ne.s32.totalorder %s95, %s96
      %p107 = scmp.eq.s32.totalorder %s23, 0
      %p108 = por %p106, %p107
      %p109 = scmp.ne.s32.totalorder %s95, %s96
      %p110 = scmp.eq.s32.totalorder %s24, 8
      %p111 = por %p109, %p110
      %p113 = scmp.ne.s32.totalorder %s96, %s112
      %p114 = scmp.eq.s32.totalorder %s24, 0
      %p115 = por %p113, %p114
      %s116 = ssub.s32 %s25, %s37
      %s117 = ssub.s32 %s26, %s33
      %s118 = sor.u32 %s116, %s117
      %p119 = scmp.eq.s32.totalorder %s118, 0
      %s121 = sadd.s32 %s120, 1
      %s122 = scalar_select %p119, %s120, %s121
      %p125 = pneg %p119
      %p126 = scmp.eq.s32.totalorder %s18, 8
      %p127 = por %p125, %p126
      %p128 = scmp.ne.s32.totalorder %s120, %s123
      %p129 = scmp.eq.s32.totalorder %s18, 0
      %p130 = por %p128, %p129
      %p131 = scmp.ne.s32.totalorder %s120, %s123
      %p132 = scmp.eq.s32.totalorder %s23, 8
      %p133 = por %p131, %p132
      %p134 = scmp.ne.s32.totalorder %s123, %s124
      %p135 = scmp.eq.s32.totalorder %s23, 0
      %p136 = por %p134, %p135
      %p137 = scmp.ne.s32.totalorder %s123, %s124
      %p138 = scmp.eq.s32.totalorder %s24, 8
      %p139 = por %p137, %p138
      %p141 = scmp.ne.s32.totalorder %s124, %s140
      %p142 = scmp.eq.s32.totalorder %s24, 0
      %p143 = por %p141, %p142
      %p144 = scmp.le.s32.totalorder 1, %s18
      %p145 = scmp.lt.s32.totalorder %s18, 10
      %p146 = pnand %p144, %p145
      %p147 = pneg %p146
      // Predicated region
      $region9: #{tpu_custom_call.1} parent=5 // pred_check
        _
      $region10: #{tpu_custom_call.1} parent=5 // pred_check_branch
        %149 = sbr.rel (%p146) target = $region12
      $region11: #{tpu_custom_call.1} parent=5 // pred_region
        %s150 = ssub.s32 %s18, 1
      $region12: #{tpu_custom_call.1} parent=5 // pred_fallthru
        _
      %p151 = scmp.lt.s32.totalorder %s18, 9
      // Predicated region
      $region13: #{tpu_custom_call.1} parent=5 // pred_check
        %p152 = pneg %p151
      $region14: #{tpu_custom_call.1} parent=5 // pred_check_branch
        %154 = sbr.rel (%p152) target = $region16
      $region15: #{tpu_custom_call.1} parent=5 // pred_region
        // Predicated region
        $region17: #{tpu_custom_call.1} parent=15 // pred_check
          %p155 = pneg %p50
        $region18: #{tpu_custom_call.1} parent=15 // pred_check_branch
          %157 = sbr.rel (%p155) target = $region20
        $region19: #{tpu_custom_call.1} parent=15 // pred_region
          %s158 = sand.u32 %s40, 1
          %s159 = scalar_lea.sflag [#allocation4], %s158
          %s160 = sand.u32 %s40, 1
          %s161 = smul.addr %s160, 64
          %s162 = scalar_lea.vmem [#allocation3], %s161
          %s163 = smul.u32 8, %s25
          %s164 = ssub.s32 18, %s163
          %p165 = scmp.lt.s32.totalorder %s164, 8
          %s166 = scalar_select %p165, %s164, 8
          %s167 = smul.u32 128, %s166
          %s169 = ssub.s32 1024, %s167
          %170 = vsyncadd %s159, %s169
          %p171 = scmp.ne.s32.totalorder 0, %s167
          %s172 = smul.addr %s163, 128
          %s173 = scalar_lea.hbm %s0, %s172
          %s174 = smul.u32 8, %s166
          %s175 = sshll.u32 %s162, 4
          %s176 = int_to_ptr.vmem [resolvable:$true] %s175
          %s177 = sshll.u32 %s174, 4
          %181 = dma.hbm_to_vmem [thread:$0]  (%p171), %s173, %s177, %s176, %s159, 128, 128, 8
        $region20: #{tpu_custom_call.1} parent=15 // pred_fallthru
          _
        // Predicated region
        $region21: #{tpu_custom_call.1} parent=15 // pred_check
          %p182 = pneg %p76
        $region22: #{tpu_custom_call.1} parent=15 // pred_check_branch
          %184 = sbr.rel (%p182) target = $region24
        $region23: #{tpu_custom_call.1} parent=15 // pred_region
          %s185 = sand.u32 %s66, 1
          %s186 = scalar_lea.sflag [#allocation7], %s185
          %s187 = sand.u32 %s66, 1
          %s188 = smul.addr %s187, 128
          %s189 = scalar_lea.vmem [#allocation6], %s188
          %s191 = ssub.s32 2048, 2048
          %192 = vsyncadd %s186, %s191
          %s193 = smul.addr %s26, 128
          %s194 = scalar_lea.hbm %s1, %s193
          %s195 = sshll.u32 %s189, 4
          %s196 = int_to_ptr.vmem [resolvable:$true] %s195
          %201 = dma.hbm_to_vmem [thread:$0]  %s194, 2048, %s196, %s186, 384, 128, 8
        $region24: #{tpu_custom_call.1} parent=15 // pred_fallthru
          _
        // Predicated region
        $region25: #{tpu_custom_call.1} parent=15 // pred_check
          %p202 = pneg %p102
        $region26: #{tpu_custom_call.1} parent=15 // pred_check_branch
          %204 = sbr.rel (%p202) target = $region28
        $region27: #{tpu_custom_call.1} parent=15 // pred_region
          %p205 = scmp.lt.s32.totalorder %s26, 2
          %s206 = scalar_select %p205, %s26, 2
          %s207 = scalar_lea.vmem %s2, %s206
        $region28: #{tpu_custom_call.1} parent=15 // pred_fallthru
          _
      $region16: #{tpu_custom_call.1} parent=5 // pred_fallthru
        _
      %p208 = scmp.le.s32.totalorder 1, %s18
      %p209 = scmp.lt.s32.totalorder %s18, 10
      %p210 = pnand %p208, %p209
      %p211 = pneg %p210
      // Predicated region
      $region29: #{tpu_custom_call.1} parent=5 // pred_check
        _
      $region30: #{tpu_custom_call.1} parent=5 // pred_check_branch
        %213 = sbr.rel (%p210) target = $region32
      $region31: #{tpu_custom_call.1} parent=5 // pred_region
        %s214 = ssub.s32 %s18, 1
        %s215 = sand.u32 %s43, 1
        %s216 = scalar_lea.sflag [#allocation4], %s215
        %s217 = sand.u32 %s43, 1
        %s218 = smul.addr %s217, 64
        %s219 = scalar_lea.vmem [#allocation3], %s218
        // Predicated region
        $region33: #{tpu_custom_call.1} parent=31 // pred_check
          %p220 = pneg %p56
        $region34: #{tpu_custom_call.1} parent=31 // pred_check_branch
          %222 = sbr.rel (%p220) target = $region36
        $region35: #{tpu_custom_call.1} parent=31 // pred_region
          %223 = dma.done %s216, 1024
        $region36: #{tpu_custom_call.1} parent=31 // pred_fallthru
          _
        %s224 = sand.u32 %s69, 1
        %s225 = scalar_lea.sflag [#allocation7], %s224
        %s226 = sand.u32 %s69, 1
        %s227 = smul.addr %s226, 128
        %s228 = scalar_lea.vmem [#allocation6], %s227
        // Predicated region
        $region37: #{tpu_custom_call.1} parent=31 // pred_check
          %p229 = pneg %p82
        $region38: #{tpu_custom_call.1} parent=31 // pred_check_branch
          %231 = sbr.rel (%p229) target = $region40
        $region39: #{tpu_custom_call.1} parent=31 // pred_region
          %232 = dma.done %s225, 2048
        $region40: #{tpu_custom_call.1} parent=31 // pred_fallthru
          _
        %s233 = sand.u32 %s43, 1
        %s234 = scalar_lea.sflag [#allocation4], %s233
        %s235 = sand.u32 %s43, 1
        %s236 = smul.addr %s235, 64
        %s237 = scalar_lea.vmem [#allocation3], %s236
        %p238 = pneg %p56
        %p239 = pneg %p53
        %s240 = sand.u32 %s69, 1
        %s241 = scalar_lea.sflag [#allocation7], %s240
        %s242 = sand.u32 %s69, 1
        %s243 = smul.addr %s242, 128
        %s244 = scalar_lea.vmem [#allocation6], %s243
        %p245 = pneg %p82
        %p246 = pneg %p79
        %p247 = scmp.lt.s32.totalorder %s28, 2
        %s248 = scalar_select %p247, %s28, 2
        %s249 = scalar_lea.vmem %s2, %s248
        %p250 = pneg %p108
        %p251 = pneg %p105
        %p252 = pneg %p136
        %p253 = pneg %p133
        %s254 = sand.u32 %s123, 1
        %s255 = scalar_lea.sflag [#allocation5], %s254
        %s256 = sand.u32 %s123, 1
        %s257 = smul.addr %s256, 64
        %s258 = scalar_lea.vmem [#allocation8], %s257
        %s259 = smul.u32 8, %s27
        %s260 = ssub.s32 18, %s259
        %p261 = scmp.lt.s32.totalorder %s260, 8
        %s262 = scalar_select %p261, %s260, 8
        %s263 = smul.u32 128, %s262
        %p264 = scmp.lt.s32.totalorder %s28, 2
        %s265 = scalar_select %p264, %s28, 2
        %s266 = scalar_lea.vmem %s2, %s265
        %s267 = smul.u32 8, %s27
        %s268 = ssub.s32 18, %s267
        %p269 = scmp.lt.s32.totalorder %s268, 8
        %s270 = scalar_select %p269, %s268, 8
        %s271 = smul.u32 128, %s270
        %p272 = scmp.eq.s32.totalorder %s28, 0
        // Predicated region
        $region41: #{tpu_custom_call.1} parent=31 // pred_check
          %p273 = pneg %p272
        $region42: #{tpu_custom_call.1} parent=31 // pred_check_branch
          %275 = sbr.rel (%p273) target = $region44
        $region43: #{tpu_custom_call.1} parent=31 // pred_region
          %v276 = vld [vmem:[%s219] sm:$0xff]
          %v277 = vld [vmem:[%s219 + $0x8] sm:$0xff]
          %v278 = vld [vmem:[%s219 + $0x10] sm:$0xff]
          %v279 = vld [vmem:[%s219 + $0x18] sm:$0xff]
          %v280 = vld [vmem:[%s219 + $0x20] sm:$0xff]
          %v281 = vld [vmem:[%s219 + $0x28] sm:$0xff]
          %v282 = vld [vmem:[%s219 + $0x30] sm:$0xff]
          %v283 = vld [vmem:[%s219 + $0x38] sm:$0xff]
          %284 = vadd.xlane.f32.xlu0 %v276
          %v285 = vpop.xlane.xlu0 %284
          %286 = vadd.xlane.f32.xlu0 %v277
          %v287 = vpop.xlane.xlu0 %286
          %288 = vadd.xlane.f32.xlu0 %v278
          %v289 = vpop.xlane.xlu0 %288
          %290 = vadd.xlane.f32.xlu0 %v279
          %v291 = vpop.xlane.xlu0 %290
          %292 = vadd.xlane.f32.xlu0 %v280
          %v293 = vpop.xlane.xlu0 %292
          %294 = vadd.xlane.f32.xlu0 %v281
          %v295 = vpop.xlane.xlu0 %294
          %296 = vadd.xlane.f32.xlu0 %v282
          %v297 = vpop.xlane.xlu0 %296
          %298 = vadd.xlane.f32.xlu0 %v283
          %v299 = vpop.xlane.xlu0 %298
          %v300 = vmul.f32 %v285, 0.0078125
          %v301 = vmul.f32 %v287, 0.0078125
          %v302 = vmul.f32 %v289, 0.0078125
          %v303 = vmul.f32 %v291, 0.0078125
          %v304 = vmul.f32 %v293, 0.0078125
          %v305 = vmul.f32 %v295, 0.0078125
          %v306 = vmul.f32 %v297, 0.0078125
          %v307 = vmul.f32 %v299, 0.0078125
          %v308 = vsub.f32 %v276, %v300
          %v309 = vsub.f32 %v277, %v301
          %v310 = vsub.f32 %v278, %v302
          %v311 = vsub.f32 %v279, %v303
          %v312 = vsub.f32 %v280, %v304
          %v313 = vsub.f32 %v281, %v305
          %v314 = vsub.f32 %v282, %v306
          %v315 = vsub.f32 %v283, %v307
          %v316 = vmul.f32 %v308, %v308
          %v317 = vmul.f32 %v309, %v309
          %v318 = vmul.f32 %v310, %v310
          %v319 = vmul.f32 %v311, %v311
          %v320 = vmul.f32 %v312, %v312
          %v321 = vmul.f32 %v313, %v313
          %v322 = vmul.f32 %v314, %v314
          %v323 = vmul.f32 %v315, %v315
          %324 = vadd.xlane.f32.xlu0 %v316
          %v325 = vpop.xlane.xlu0 %324
          %326 = vadd.xlane.f32.xlu0 %v317
          %v327 = vpop.xlane.xlu0 %326
          %328 = vadd.xlane.f32.xlu0 %v318
          %v329 = vpop.xlane.xlu0 %328
          %330 = vadd.xlane.f32.xlu0 %v319
          %v331 = vpop.xlane.xlu0 %330
          %332 = vadd.xlane.f32.xlu0 %v320
          %v333 = vpop.xlane.xlu0 %332
          %334 = vadd.xlane.f32.xlu0 %v321
          %v335 = vpop.xlane.xlu0 %334
          %336 = vadd.xlane.f32.xlu0 %v322
          %v337 = vpop.xlane.xlu0 %336
          %338 = vadd.xlane.f32.xlu0 %v323
          %v339 = vpop.xlane.xlu0 %338
          %v340 = vmul.f32 %v325, 0.0078125
          %v341 = vmul.f32 %v327, 0.0078125
          %v342 = vmul.f32 %v329, 0.0078125
          %v343 = vmul.f32 %v331, 0.0078125
          %v344 = vmul.f32 %v333, 0.0078125
          %v345 = vmul.f32 %v335, 0.0078125
          %v346 = vmul.f32 %v337, 0.0078125
          %v347 = vmul.f32 %v339, 0.0078125
          %v348 = vadd.f32 %v340, 1e-05
          %v349 = vadd.f32 %v341, 1e-05
          %v350 = vadd.f32 %v342, 1e-05
          %v351 = vadd.f32 %v343, 1e-05
          %v352 = vadd.f32 %v344, 1e-05
          %v353 = vadd.f32 %v345, 1e-05
          %v354 = vadd.f32 %v346, 1e-05
          %v355 = vadd.f32 %v347, 1e-05
          %v356 = vrsqrt.pop %v348
          %v357 = vrsqrt.pop %v349
          %v358 = vrsqrt.pop %v350
          %v359 = vrsqrt.pop %v351
          %v360 = vrsqrt.pop %v352
          %v361 = vrsqrt.pop %v353
          %v362 = vrsqrt.pop %v354
          %v363 = vrsqrt.pop %v355
          %v364 = vmul.f32 %v308, %v356
          %v365 = vmul.f32 %v309, %v357
          %v366 = vmul.f32 %v310, %v358
          %v367 = vmul.f32 %v311, %v359
          %v368 = vmul.f32 %v312, %v360
          %v369 = vmul.f32 %v313, %v361
          %v370 = vmul.f32 %v314, %v362
          %v371 = vmul.f32 %v315, %v363
          %372 = vst [vmem:[#allocation2] sm:$0xff] %v364
          %373 = vst [vmem:[#allocation2 + $0x8] sm:$0xff] %v365
          %374 = vst [vmem:[#allocation2 + $0x10] sm:$0xff] %v366
          %375 = vst [vmem:[#allocation2 + $0x18] sm:$0xff] %v367
          %376 = vst [vmem:[#allocation2 + $0x20] sm:$0xff] %v368
          %377 = vst [vmem:[#allocation2 + $0x28] sm:$0xff] %v369
          %378 = vst [vmem:[#allocation2 + $0x30] sm:$0xff] %v370
          %379 = vst [vmem:[#allocation2 + $0x38] sm:$0xff] %v371
        $region44: #{tpu_custom_call.1} parent=31 // pred_fallthru
          _
        %v380 = vld [vmem:[#allocation2] sm:$0xff]
        %v381 = vld [vmem:[#allocation2 + $0x8] sm:$0xff]
        %v382 = vld [vmem:[#allocation2 + $0x10] sm:$0xff]
        %v383 = vld [vmem:[#allocation2 + $0x18] sm:$0xff]
        %v384 = vld [vmem:[#allocation2 + $0x20] sm:$0xff]
        %v385 = vld [vmem:[#allocation2 + $0x28] sm:$0xff]
        %v386 = vld [vmem:[#allocation2 + $0x30] sm:$0xff]
        %v387 = vld [vmem:[#allocation2 + $0x38] sm:$0xff]
        %v388 = vld [vmem:[%s228] sm:$0xff]
        %v389 = vld [vmem:[%s228 + $0x8] sm:$0xff]
        %v390 = vld [vmem:[%s228 + $0x10] sm:$0xff]
        %v391 = vld [vmem:[%s228 + $0x18] sm:$0xff]
        %v392 = vld [vmem:[%s228 + $0x20] sm:$0xff]
        %v393 = vld [vmem:[%s228 + $0x28] sm:$0xff]
        %v394 = vld [vmem:[%s228 + $0x30] sm:$0xff]
        %v395 = vld [vmem:[%s228 + $0x38] sm:$0xff]
        %v396 = vld [vmem:[%s228 + $0x40] sm:$0xff]
        %v397 = vld [vmem:[%s228 + $0x48] sm:$0xff]
        %v398 = vld [vmem:[%s228 + $0x50] sm:$0xff]
        %v399 = vld [vmem:[%s228 + $0x58] sm:$0xff]
        %v400 = vld [vmem:[%s228 + $0x60] sm:$0xff]
        %v401 = vld [vmem:[%s228 + $0x68] sm:$0xff]
        %v402 = vld [vmem:[%s228 + $0x70] sm:$0xff]
        %v403 = vld [vmem:[%s228 + $0x78] sm:$0xff]
        %v404 = vld [vmem:[%s266] sm:$0x1]
        %v406 = vlaneseq
        %v407 = vshrl.u32 %v406, 7
        %v408 = vsub.s32 0, %v407
        %v409 = vrot.slane %v404, %v408
        %411 = vmatprep.subr.mxu0 0.0
        %412 = vmatpush1.msra.mxu0 %v388
        %413 = vmatprep.subr.mxu0 0.0
        %414 = vmatpush1.msra.mxu0 %v389
        %415 = vmatprep.subr.mxu0 0.0
        %416 = vmatpush1.msra.mxu0 %v390
        %417 = vmatprep.subr.mxu0 0.0
        %418 = vmatpush1.msra.mxu0 %v391
        %419 = vmatprep.subr.mxu0 0.0
        %420 = vmatpush1.msra.mxu0 %v392
        %421 = vmatprep.subr.mxu0 0.0
        %422 = vmatpush1.msra.mxu0 %v393
        %423 = vmatprep.subr.mxu0 0.0
        %424 = vmatpush1.msra.mxu0 %v394
        %425 = vmatprep.subr.mxu0 0.0
        %426 = vmatpush1.msra.mxu0 %v395
        %427 = vmatprep.subr.mxu0 0.0
        %428 = vmatpush1.msra.mxu0 %v396
        %429 = vmatprep.subr.mxu0 0.0
        %430 = vmatpush1.msra.mxu0 %v397
        %431 = vmatprep.subr.mxu0 0.0
        %432 = vmatpush1.msra.mxu0 %v398
        %433 = vmatprep.subr.mxu0 0.0
        %434 = vmatpush1.msra.mxu0 %v399
        %435 = vmatprep.subr.mxu0 0.0
        %436 = vmatpush1.msra.mxu0 %v400
        %437 = vmatprep.subr.mxu0 0.0
        %438 = vmatpush1.msra.mxu0 %v401
        %439 = vmatprep.subr.mxu0 0.0
        %440 = vmatpush1.msra.mxu0 %v402
        %441 = vmatprep.subr.mxu0 0.0
        %442 = vmatpush1.msra.mxu0 %v403
        %443 = vmatprep.subr.mxu0 0.0
        %444 = vmatpush1.msra.mxu0 0.0
        %445 = vmatprep.subr.mxu0 0.0
        %446 = vmatpush1.msra.mxu0 0.0
        %447 = vmatprep.subr.mxu0 0.0
        %448 = vmatpush1.msra.mxu0 0.0
        %449 = vmatprep.subr.mxu0 0.0
        %450 = vmatpush1.msra.mxu0 0.0
        %451 = vmatprep.subr.mxu0 0.0
        %452 = vmatpush1.msra.mxu0 0.0
        %453 = vmatprep.subr.mxu0 0.0
        %454 = vmatpush1.msra.mxu0 0.0
        %455 = vmatprep.subr.mxu0 0.0
        %456 = vmatpush1.msra.mxu0 0.0
        %457 = vmatprep.subr.mxu0 0.0
        %458 = vmatpush1.msra.mxu0 0.0
        %459 = vmatprep.subr.mxu0 0.0
        %460 = vmatpush1.msra.mxu0 0.0
        %461 = vmatprep.subr.mxu0 0.0
        %462 = vmatpush1.msra.mxu0 0.0
        %463 = vmatprep.subr.mxu0 0.0
        %464 = vmatpush1.msra.mxu0 0.0
        %465 = vmatprep.subr.mxu0 0.0
        %466 = vmatpush1.msra.mxu0 0.0
        %467 = vmatprep.subr.mxu0 0.0
        %468 = vmatpush1.msra.mxu0 0.0
        %469 = vmatprep.subr.mxu0 0.0
        %470 = vmatpush1.msra.mxu0 0.0
        %471 = vmatprep.subr.mxu0 0.0
        %472 = vmatpush1.msra.mxu0 0.0
        %473 = vmatprep.subr.mxu0 0.0
        %474 = vmatpush1.msra.mxu0 0.0
        %475 = vmatprep.mubr.f32.mxu0 0.0
        %476 = vmatmul.mubr.f32.gmra.mrb[0].mxu0 %v380
        %v477 = vpop.f32.mrb[0].mxu0
        %v478 = vadd.f32 %v409, %v477
        %v479 = vpop.f32.mrb[0].mxu0
        %480 = vmatprep.mubr.f32.mxu0 0.0
        %481 = vmatmul.mubr.f32.gmra.mrb[0].mxu0 %v381
        %v482 = vpop.f32.mrb[0].mxu0
        %v483 = vadd.f32 %v409, %v482
        %v484 = vpop.f32.mrb[0].mxu0
        %485 = vmatprep.mubr.f32.mxu0 0.0
        %486 = vmatmul.mubr.f32.gmra.mrb[0].mxu0 %v382
        %v487 = vpop.f32.mrb[0].mxu0
        %v488 = vadd.f32 %v409, %v487
        %v489 = vpop.f32.mrb[0].mxu0
        %490 = vmatprep.mubr.f32.mxu0 0.0
        %491 = vmatmul.mubr.f32.gmra.mrb[0].mxu0 %v383
        %v492 = vpop.f32.mrb[0].mxu0
        %v493 = vadd.f32 %v409, %v492
        %v494 = vpop.f32.mrb[0].mxu0
        %495 = vmatprep.mubr.f32.mxu0 0.0
        %496 = vmatmul.mubr.f32.gmra.mrb[0].mxu0 %v384
        %v497 = vpop.f32.mrb[0].mxu0
        %v498 = vadd.f32 %v409, %v497
        %v499 = vpop.f32.mrb[0].mxu0
        %500 = vmatprep.mubr.f32.mxu0 0.0
        %501 = vmatmul.mubr.f32.gmra.mrb[0].mxu0 %v385
        %v502 = vpop.f32.mrb[0].mxu0
        %v503 = vadd.f32 %v409, %v502
        %v504 = vpop.f32.mrb[0].mxu0
        %505 = vmatprep.mubr.f32.mxu0 0.0
        %506 = vmatmul.mubr.f32.gmra.mrb[0].mxu0 %v386
        %v507 = vpop.f32.mrb[0].mxu0
        %v508 = vadd.f32 %v409, %v507
        %v509 = vpop.f32.mrb[0].mxu0
        %510 = vmatprep.mubr.f32.mxu0 0.0
        %511 = vmatmul.mubr.f32.gmra.mrb[0].mxu0 %v387
        %v512 = vpop.f32.mrb[0].mxu0
        %v513 = vadd.f32 %v409, %v512
        %v514 = vpop.f32.mrb[0].mxu0
        %515 = vdwg.mxu0
        %516 = vst [vmem:[%s258] sm:$0xff] %v478
        %517 = vst [vmem:[%s258 + $0x8] sm:$0xff] %v483
        %518 = vst [vmem:[%s258 + $0x10] sm:$0xff] %v488
        %519 = vst [vmem:[%s258 + $0x18] sm:$0xff] %v493
        %520 = vst [vmem:[%s258 + $0x20] sm:$0xff] %v498
        %521 = vst [vmem:[%s258 + $0x28] sm:$0xff] %v503
        %522 = vst [vmem:[%s258 + $0x30] sm:$0xff] %v508
        %523 = vst [vmem:[%s258 + $0x38] sm:$0xff] %v513
        %s524 = sand.u32 %s123, 1
        %s525 = scalar_lea.sflag [#allocation5], %s524
        %s526 = sand.u32 %s123, 1
        %s527 = smul.addr %s526, 64
        %s528 = scalar_lea.vmem [#allocation8], %s527
        // Predicated region
        $region45: #{tpu_custom_call.1} parent=31 // pred_check
          %p529 = pneg %p133
        $region46: #{tpu_custom_call.1} parent=31 // pred_check_branch
          %531 = sbr.rel (%p529) target = $region48
        $region47: #{tpu_custom_call.1} parent=31 // pred_region
          %s532 = smul.u32 8, %s27
          %s533 = ssub.s32 18, %s532
          %p534 = scmp.lt.s32.totalorder %s533, 8
          %s535 = scalar_select %p534, %s533, 8
          %s536 = smul.u32 128, %s535
          %s538 = ssub.s32 1024, %s536
          %539 = vsyncadd %s525, %s538
          %p540 = scmp.ne.s32.totalorder 0, %s536
          %s541 = smul.addr %s532, 3
          %s542 = sadd.s32 %s28, %s541
          %s543 = smul.addr %s542, 128
          %s544 = scalar_lea.hbm %s3, %s543
          %s545 = smul.u32 8, %s535
          %s546 = sshll.u32 %s528, 4
          %s547 = int_to_ptr.vmem [resolvable:$true] %s546
          %s548 = sshll.u32 %s545, 4
          %552 = dma.vmem_to_hbm [thread:$0]  (%p540), %s547, %s548, %s544, %s525, 128, 384, 8
        $region48: #{tpu_custom_call.1} parent=31 // pred_fallthru
          _
      $region32: #{tpu_custom_call.1} parent=5 // pred_fallthru
        _
      %p553 = scmp.le.s32.totalorder 2, %s18
      // Predicated region
      $region49: #{tpu_custom_call.1} parent=5 // pred_check
        %p554 = pneg %p553
      $region50: #{tpu_custom_call.1} parent=5 // pred_check_branch
        %556 = sbr.rel (%p554) target = $region52
      $region51: #{tpu_custom_call.1} parent=5 // pred_region
        %s557 = ssub.s32 %s18, 2
        // Predicated region
        $region53: #{tpu_custom_call.1} parent=51 // pred_check
          %p558 = pneg %p139
        $region54: #{tpu_custom_call.1} parent=51 // pred_check_branch
          %560 = sbr.rel (%p558) target = $region56
        $region55: #{tpu_custom_call.1} parent=51 // pred_region
          %s561 = sand.u32 %s124, 1
          %s562 = scalar_lea.sflag [#allocation5], %s561
          %s563 = sand.u32 %s124, 1
          %s564 = smul.addr %s563, 64
          %s565 = scalar_lea.vmem [#allocation8], %s564
          %566 = dma.done %s562, 1024
        $region56: #{tpu_custom_call.1} parent=51 // pred_fallthru
          _
      $region52: #{tpu_custom_call.1} parent=5 // pred_fallthru
        _
    $region6: #{tpu_custom_call.1} parent=1 // loop_footer
      %s22 = sadd.s32 1, %s18
    $region7: #{tpu_custom_call.1} parent=1 // loop_footer_branch
      %17 = sbr.rel target = $region3
    $region8: #{tpu_custom_call.1} parent=1 // loop_exit
      _
    %567 = vsyncpa [#allocation4], 1
    %s568 = scalar_lea.sflag [#allocation4], 1
    %569 = vsyncpa %s568, 1
    %570 = vsyncpa [#allocation7], 1
    %s571 = scalar_lea.sflag [#allocation7], 1
    %572 = vsyncpa %s571, 1
    %573 = vsyncpa [#allocation5], 1
    %s574 = scalar_lea.sflag [#allocation5], 1
    %575 = vsyncpa %s574, 1

</llo_original>
